<compile_context>
chip_gen: v6e
topology: v6e:2x2x1
jax: 0.10.0
libtpu: 0.0.40
codegen_flags: <defaults>
</compile_context>

<pallas_src>
import jax
import jax.numpy as jnp
import numpy as np
from jax.experimental import pallas as pl
from jax.experimental.pallas import tpu as pltpu


def _targeted_loss_kernel(z_ref, cond_ref, l_ref, lt_ref, out_ref):
    """One spatial tile, all batches.

    z_ref   : (B, C, TS)  native dtype (f32 / bf16)
    cond_ref: (B, TS)     int8, nonzero == selected pixel
    l_ref   : (B, TS)     int8/int32 labels
    lt_ref  : (B, TS)     int8/int32 target labels
    out_ref : (1, 1)      f32 SMEM partial sum for this grid step
    """
    C = z_ref.shape[1]

    cond = cond_ref[...]
    l = l_ref[...].astype(jnp.int32)
    lt = lt_ref[...].astype(jnp.int32)

    # Fold the condition mask into the labels: label == C never matches any
    # channel in the one-hot select below, so masked-out pixels contribute 0.
    invalid = jnp.int32(C)
    l_m = jnp.where(cond != 0, l, invalid)
    lt_m = jnp.where(cond != 0, lt, invalid)

    # diff[b, s] = z[b, l[b,s], s] - z[b, lt[b,s], s]
    # Gather over the small, static channel axis as an unrolled one-hot select
    # (pure VPU work). For large C switch to lax.fori_loop(..., unroll=k).
    acc = jnp.zeros(l_m.shape, jnp.float32)
    for c in range(C):
        sel = ((l_m == c).astype(jnp.int32)
               - (lt_m == c).astype(jnp.int32)).astype(jnp.float32)
        acc = acc + z_ref[:, c, :].astype(jnp.float32) * sel

    out_ref[0, 0] = jnp.sum(acc)


def targeted_loss(z, condition, l, l_target, *, max_spatial_tile=2048):
    """Pallas equivalent of targetedLoss.forward(z, condition, l, l_target)."""
    B, C, H, W = z.shape
    HW = H * W

    # Lane-dense layout + narrow dtypes (keep z in its native dtype).
    label_dtype = jnp.int8 if C <= 127 else jnp.int32
    z2 = z.reshape(B, C, HW)
    cond2 = condition.reshape(B, HW).astype(jnp.int8)
    l2 = l.reshape(B, HW).astype(label_dtype)
    lt2 = l_target.reshape(B, HW).astype(label_dtype)

    # Spatial tile: a multiple of 128, as large as possible while keeping the
    # double-buffered input blocks comfortably inside scoped VMEM (v7x has the
    # smallest budget, so stay well under ~32 MiB defaults).
    bytes_per_col = B * (C * z2.dtype.itemsize + 2 * l2.dtype.itemsize + 1)
    vmem_budget = 8 * 1024 * 1024  # per-block input bytes (x2 for double buffering)
    ts = (vmem_budget // (2 * bytes_per_col)) // 128 * 128
    ts = max(128, min(ts, max_spatial_tile, pl.cdiv(HW, 128) * 128))
    hw_pad = pl.cdiv(HW, ts) * ts
    if hw_pad != HW:
        pad = hw_pad - HW
        z2 = jnp.pad(z2, ((0, 0), (0, 0), (0, pad)))
        cond2 = jnp.pad(cond2, ((0, 0), (0, pad)))  # padded pixels: cond==0 -> masked out
        l2 = jnp.pad(l2, ((0, 0), (0, pad)))
        lt2 = jnp.pad(lt2, ((0, 0), (0, pad)))
    num_s = hw_pad // ts

    partials = pl.pallas_call(
        _targeted_loss_kernel,
        out_shape=jax.ShapeDtypeStruct((num_s, 1), jnp.float32),
        grid_spec=pltpu.PrefetchScalarGridSpec(
            num_scalar_prefetch=0,
            grid=(num_s,),
            in_specs=[
                pl.BlockSpec((B, C, ts), lambda s: (0, 0, s)),
                pl.BlockSpec((B, ts), lambda s: (0, s)),
                pl.BlockSpec((B, ts), lambda s: (0, s)),
                pl.BlockSpec((B, ts), lambda s: (0, s)),
            ],
            out_specs=pl.BlockSpec((1, 1), lambda s: (s, 0),
                                   memory_space=pltpu.SMEM),
        ),
        compiler_params=pltpu.CompilerParams(
            # Independent per-tile partials: lets Mosaic shard the grid across
            # both TensorCores on v7x; harmless on v5e/v6e.
            dimension_semantics=("parallel",),
        ),
    )(z2, cond2, l2, lt2)

    # Tiny final reduction over the per-tile partial sums.
    return jnp.sum(partials)


if __name__ == "__main__":
    key = jax.random.PRNGKey(0)
    k1, k2, k3, k4 = jax.random.split(key, 4)
    B, C, H, W = 2, 4, 16, 16

    z = jax.random.normal(k1, (B, C, H, W), dtype=jnp.float32)
    condition = jax.random.uniform(k2, (B, H, W)) > 0.5
    l = jax.random.randint(k3, (B, H, W), 0, C, dtype=jnp.int32).astype(jnp.int8)
    l_target = jax.random.randint(k4, (B, H, W), 0, C, dtype=jnp.int32).astype(jnp.int8)

    loss = jax.block_until_ready(targeted_loss(z, condition, l, l_target))

    # Pure-numpy reference mirroring the PyTorch advanced-indexing semantics.
    zn, cn = np.asarray(z), np.asarray(condition)
    ln = np.asarray(l).astype(np.int64)
    ltn = np.asarray(l_target).astype(np.int64)
    bi, hi, wi = np.where(cn)
    z_good = zn[bi, ln[bi, hi, wi], hi, wi]
    z_bad = zn[bi, ltn[bi, hi, wi], hi, wi]
    ref = np.sum(z_good - z_bad)
    assert np.allclose(np.asarray(loss), ref, rtol=1e-5, atol=1e-5), (float(loss), float(ref))

    print("KERNEL_OK")
</pallas_src>

<mosaic_0001>
module attributes {stable_mosaic.version = 11 : i64} {
  func.func @_targeted_loss_kernel(%arg0: i32, %arg1: memref<2x4x256xf32, #tpu.memory_space<vmem>>, %arg2: memref<2x256xi8, #tpu.memory_space<vmem>>, %arg3: memref<2x256xi8, #tpu.memory_space<vmem>>, %arg4: memref<2x256xi8, #tpu.memory_space<vmem>>, %arg5: memref<1x1xf32, #tpu.memory_space<smem>>) attributes {dimension_semantics = [#tpu.dimension_semantics<parallel>], iteration_bounds = array<i64: 1>, scalar_prefetch = 0 : i64, scratch_operands = 0 : i64, tpu.core_type = #tpu.core_type<tc>, window_params = [{transform_indices = @transform_0, window_bounds = array<i64: 2, 4, 256>}, {transform_indices = @transform_1, window_bounds = array<i64: 2, 256>}, {transform_indices = @transform_2, window_bounds = array<i64: 2, 256>}, {transform_indices = @transform_3, window_bounds = array<i64: 2, 256>}, {transform_indices = @transform_4, window_bounds = array<i64: 1, 1>}]} {
    %c0 = arith.constant 0 : index
    %c0_0 = arith.constant 0 : index
    %0 = vector.load %arg2[%c0, %c0_0] : memref<2x256xi8, #tpu.memory_space<vmem>>, vector<2x256xi8>
    %c0_1 = arith.constant 0 : index
    %c0_2 = arith.constant 0 : index
    %1 = vector.load %arg3[%c0_1, %c0_2] : memref<2x256xi8, #tpu.memory_space<vmem>>, vector<2x256xi8>
    %2 = arith.extsi %1 : vector<2x256xi8> to vector<2x256xi32>
    %c0_3 = arith.constant 0 : index
    %c0_4 = arith.constant 0 : index
    %3 = vector.load %arg4[%c0_3, %c0_4] : memref<2x256xi8, #tpu.memory_space<vmem>>, vector<2x256xi8>
    %4 = arith.extsi %3 : vector<2x256xi8> to vector<2x256xi32>
    %c0_i8 = arith.constant 0 : i8
    %5 = vector.broadcast %c0_i8 : i8 to vector<2x256xi8>
    %6 = arith.cmpi ne, %0, %5 : vector<2x256xi8>
    %c4_i32 = arith.constant 4 : i32
    %7 = vector.broadcast %c4_i32 : i32 to vector<2x256xi32>
    %8 = arith.select %6, %2, %7 : vector<2x256xi1>, vector<2x256xi32>
    %c0_i8_5 = arith.constant 0 : i8
    %9 = vector.broadcast %c0_i8_5 : i8 to vector<2x256xi8>
    %10 = arith.cmpi ne, %0, %9 : vector<2x256xi8>
    %c4_i32_6 = arith.constant 4 : i32
    %11 = vector.broadcast %c4_i32_6 : i32 to vector<2x256xi32>
    %12 = arith.select %10, %4, %11 : vector<2x256xi1>, vector<2x256xi32>
    %cst = arith.constant 0.000000e+00 : f32
    %13 = vector.broadcast %cst : f32 to vector<2x256xf32>
    %c0_i32 = arith.constant 0 : i32
    %14 = vector.broadcast %c0_i32 : i32 to vector<2x256xi32>
    %15 = arith.cmpi eq, %8, %14 : vector<2x256xi32>
    %16 = arith.extui %15 : vector<2x256xi1> to vector<2x256xi32>
    %c0_i32_7 = arith.constant 0 : i32
    %17 = vector.broadcast %c0_i32_7 : i32 to vector<2x256xi32>
    %18 = arith.cmpi eq, %12, %17 : vector<2x256xi32>
    %19 = arith.extui %18 : vector<2x256xi1> to vector<2x256xi32>
    %20 = arith.subi %16, %19 : vector<2x256xi32>
    %21 = arith.sitofp %20 : vector<2x256xi32> to vector<2x256xf32>
    %c0_8 = arith.constant 0 : index
    %c0_9 = arith.constant 0 : index
    %c0_10 = arith.constant 0 : index
    %22 = vector.load %arg1[%c0_8, %c0_9, %c0_10] : memref<2x4x256xf32, #tpu.memory_space<vmem>>, vector<2x1x256xf32>
    %23 = vector.shape_cast %22 : vector<2x1x256xf32> to vector<2x256xf32>
    %24 = arith.mulf %23, %21 : vector<2x256xf32>
    %25 = arith.addf %13, %24 : vector<2x256xf32>
    %c1_i32 = arith.constant 1 : i32
    %26 = vector.broadcast %c1_i32 : i32 to vector<2x256xi32>
    %27 = arith.cmpi eq, %8, %26 : vector<2x256xi32>
    %28 = arith.extui %27 : vector<2x256xi1> to vector<2x256xi32>
    %c1_i32_11 = arith.constant 1 : i32
    %29 = vector.broadcast %c1_i32_11 : i32 to vector<2x256xi32>
    %30 = arith.cmpi eq, %12, %29 : vector<2x256xi32>
    %31 = arith.extui %30 : vector<2x256xi1> to vector<2x256xi32>
    %32 = arith.subi %28, %31 : vector<2x256xi32>
    %33 = arith.sitofp %32 : vector<2x256xi32> to vector<2x256xf32>
    %c0_12 = arith.constant 0 : index
    %c1 = arith.constant 1 : index
    %c0_13 = arith.constant 0 : index
    %34 = vector.load %arg1[%c0_12, %c1, %c0_13] : memref<2x4x256xf32, #tpu.memory_space<vmem>>, vector<2x1x256xf32>
    %35 = vector.shape_cast %34 : vector<2x1x256xf32> to vector<2x256xf32>
    %36 = arith.mulf %35, %33 : vector<2x256xf32>
    %37 = arith.addf %25, %36 : vector<2x256xf32>
    %c2_i32 = arith.constant 2 : i32
    %38 = vector.broadcast %c2_i32 : i32 to vector<2x256xi32>
    %39 = arith.cmpi eq, %8, %38 : vector<2x256xi32>
    %40 = arith.extui %39 : vector<2x256xi1> to vector<2x256xi32>
    %c2_i32_14 = arith.constant 2 : i32
    %41 = vector.broadcast %c2_i32_14 : i32 to vector<2x256xi32>
    %42 = arith.cmpi eq, %12, %41 : vector<2x256xi32>
    %43 = arith.extui %42 : vector<2x256xi1> to vector<2x256xi32>
    %44 = arith.subi %40, %43 : vector<2x256xi32>
    %45 = arith.sitofp %44 : vector<2x256xi32> to vector<2x256xf32>
    %c0_15 = arith.constant 0 : index
    %c2 = arith.constant 2 : index
    %c0_16 = arith.constant 0 : index
    %46 = vector.load %arg1[%c0_15, %c2, %c0_16] : memref<2x4x256xf32, #tpu.memory_space<vmem>>, vector<2x1x256xf32>
    %47 = vector.shape_cast %46 : vector<2x1x256xf32> to vector<2x256xf32>
    %48 = arith.mulf %47, %45 : vector<2x256xf32>
    %49 = arith.addf %37, %48 : vector<2x256xf32>
    %c3_i32 = arith.constant 3 : i32
    %50 = vector.broadcast %c3_i32 : i32 to vector<2x256xi32>
    %51 = arith.cmpi eq, %8, %50 : vector<2x256xi32>
    %52 = arith.extui %51 : vector<2x256xi1> to vector<2x256xi32>
    %c3_i32_17 = arith.constant 3 : i32
    %53 = vector.broadcast %c3_i32_17 : i32 to vector<2x256xi32>
    %54 = arith.cmpi eq, %12, %53 : vector<2x256xi32>
    %55 = arith.extui %54 : vector<2x256xi1> to vector<2x256xi32>
    %56 = arith.subi %52, %55 : vector<2x256xi32>
    %57 = arith.sitofp %56 : vector<2x256xi32> to vector<2x256xf32>
    %c0_18 = arith.constant 0 : index
    %c3 = arith.constant 3 : index
    %c0_19 = arith.constant 0 : index
    %58 = vector.load %arg1[%c0_18, %c3, %c0_19] : memref<2x4x256xf32, #tpu.memory_space<vmem>>, vector<2x1x256xf32>
    %59 = vector.shape_cast %58 : vector<2x1x256xf32> to vector<2x256xf32>
    %60 = arith.mulf %59, %57 : vector<2x256xf32>
    %61 = arith.addf %49, %60 : vector<2x256xf32>
    %62 = vector.shape_cast %61 : vector<2x256xf32> to vector<1x2x256xf32>
    %cst_20 = arith.constant dense<0.000000e+00> : vector<1xf32>
    %63 = vector.multi_reduction <add>, %62, %cst_20 [1, 2] : vector<1x2x256xf32> to vector<1xf32>
    %64 = vector.shape_cast %63 : vector<1xf32> to vector<1x1x1xf32>
    %65 = vector.extract %64[0, 0, 0] : f32 from vector<1x1x1xf32>
    %c0_21 = arith.constant 0 : index
    %c0_22 = arith.constant 0 : index
    %66 = memref.load %arg5[%c0_21, %c0_22] : memref<1x1xf32, #tpu.memory_space<smem>>
    memref.store %65, %arg5[%c0_21, %c0_22] : memref<1x1xf32, #tpu.memory_space<smem>>
    return
  }
  func.func @transform_0(%arg0: i32) -> (i32, i32, i32) {
    %c0_i32 = arith.constant 0 : i32
    %c0_i32_0 = arith.constant 0 : i32
    %c0_i32_1 = arith.constant 0 : i32
    return %c0_i32, %c0_i32_0, %arg0 : i32, i32, i32
  }
  func.func @transform_1(%arg0: i32) -> (i32, i32) {
    %c0_i32 = arith.constant 0 : i32
    %c0_i32_0 = arith.constant 0 : i32
    return %c0_i32, %arg0 : i32, i32
  }
  func.func @transform_2(%arg0: i32) -> (i32, i32) {
    %c0_i32 = arith.constant 0 : i32
    %c0_i32_0 = arith.constant 0 : i32
    return %c0_i32, %arg0 : i32, i32
  }
  func.func @transform_3(%arg0: i32) -> (i32, i32) {
    %c0_i32 = arith.constant 0 : i32
    %c0_i32_0 = arith.constant 0 : i32
    return %c0_i32, %arg0 : i32, i32
  }
  func.func @transform_4(%arg0: i32) -> (i32, i32) {
    %c0_i32 = arith.constant 0 : i32
    %c0_i32_0 = arith.constant 0 : i32
    return %arg0, %c0_i32 : i32, i32
  }
}

</mosaic_0001>

<llo_original>
// kernel: tpu_custom_call.1
$region0: #{tpu_custom_call.1}
  #allocation0 [shape = 'u32[]', space=smem, size = 0x4, offset = 0x4, fixed_abs, tag = 'smem constant byte address 0x4 - core index']
  #allocation1 [shape = 'u32[144,128]{1,0:T(1,128)}', space=vmem, size = 0x12000, scoped, tag = 'internal scratch']
  %s0 = inlined_call_operand.hbm [shape: f32[2,4,256], index: 0, kind: input, shape index: {}]
  %s1 = inlined_call_operand.hbm [shape: s8[2,256], index: 1, kind: input, shape index: {}]
  %s2 = inlined_call_operand.vmem [shape: s8[2,256], index: 2, kind: input, shape index: {}]
  %s3 = inlined_call_operand.vmem [shape: s8[2,256], index: 3, kind: input, shape index: {}]
  %s4 = inlined_call_operand.hbm [shape: f32[1,1], index: 4, kind: output, shape index: {}]
  %s5 = sld [smem:[#allocation0]]
  $region34: #{tpu_custom_call.1} parent=0
    _
  %s7 = ssub.s32 1, %s5
  %s8 = scalar_select 0, %s7, %s5
  $region1: #{tpu_custom_call.1} parent=0
    #allocation2 [shape = 'u8[8192]{0}', space=vmem, size = 0x2000, scoped, tag = 'input window, operand 0, single buffered']
    #allocation3 [shape = 's32[1]{0}', space=sflag, size = 0x4, scoped, tag = 'scoped memory for tpu_custom_call.1']
    #allocation4 [shape = 's32[1]{0}', space=sflag, size = 0x4, scoped, tag = 'scoped memory for tpu_custom_call.1']
    #allocation5 [shape = 'u8[1024]{0}', space=vmem, size = 0x400, scoped, tag = 'input window, operand 1, single buffered']
    #allocation6 [shape = 's32[1]{0}', space=sflag, size = 0x4, scoped, tag = 'scoped memory for tpu_custom_call.1']
    #allocation7 [shape = 'u8[512]{0}', space=smem, size = 0x200, scoped, tag = 'output window, operand 0, single buffered']
    %9 = vsyncpa [#allocation3], 0
    %10 = vsyncpa [#allocation6], 0
    %11 = vsyncpa [#allocation4], 0
    // Predicated region
    $region2: #{tpu_custom_call.1} parent=1 // pred_check
      _
    $region3: #{tpu_custom_call.1} parent=1 // pred_check_branch
      %13 = sbr.rel (0) target = $region5
    $region4: #{tpu_custom_call.1} parent=1 // pred_region
      %s15 = ssub.s32 256, 256
      %16 = vsyncadd [#allocation3], %s15
      %s17 = sshll.u32 [#allocation2], 4
      %s18 = int_to_ptr.vmem [resolvable:$true] %s17
      %23 = dma.hbm_to_vmem [thread:$0]  %s0, 256, %s18, [#allocation3], 128, 128, 8
    $region5: #{tpu_custom_call.1} parent=1 // pred_fallthru
      _
    // Predicated region
    $region6: #{tpu_custom_call.1} parent=1 // pred_check
      _
    $region7: #{tpu_custom_call.1} parent=1 // pred_check_branch
      %25 = sbr.rel (0) target = $region9
    $region8: #{tpu_custom_call.1} parent=1 // pred_region
      %s27 = ssub.s32 32, 32
      %28 = vsyncadd [#allocation6], %s27
      %s30 = sshll.u32 [#allocation5], 4
      %s31 = int_to_ptr.vmem [resolvable:$true] %s30
      %33 = dma.hbm_to_vmem [thread:$0]  %s1, 32, %s31, [#allocation6]
    $region9: #{tpu_custom_call.1} parent=1 // pred_fallthru
      _
    // Predicated region
    $region10: #{tpu_custom_call.1} parent=1 // pred_check
      _
    $region11: #{tpu_custom_call.1} parent=1 // pred_check_branch
      %35 = sbr.rel (0) target = $region13
    $region12: #{tpu_custom_call.1} parent=1 // pred_region
      _
    $region13: #{tpu_custom_call.1} parent=1 // pred_fallthru
      _
    // Predicated region
    $region14: #{tpu_custom_call.1} parent=1 // pred_check
      _
    $region15: #{tpu_custom_call.1} parent=1 // pred_check_branch
      %37 = sbr.rel (0) target = $region17
    $region16: #{tpu_custom_call.1} parent=1 // pred_region
      _
    $region17: #{tpu_custom_call.1} parent=1 // pred_fallthru
      _
    // Predicated region
    $region18: #{tpu_custom_call.1} parent=1 // pred_check
      _
    $region19: #{tpu_custom_call.1} parent=1 // pred_check_branch
      %39 = sbr.rel (0) target = $region21
    $region20: #{tpu_custom_call.1} parent=1 // pred_region
      %40 = dma.done [#allocation3], 256
    $region21: #{tpu_custom_call.1} parent=1 // pred_fallthru
      _
    // Predicated region
    $region22: #{tpu_custom_call.1} parent=1 // pred_check
      _
    $region23: #{tpu_custom_call.1} parent=1 // pred_check_branch
      %42 = sbr.rel (0) target = $region25
    $region24: #{tpu_custom_call.1} parent=1 // pred_region
      %43 = dma.done [#allocation6], 32
    $region25: #{tpu_custom_call.1} parent=1 // pred_fallthru
      _
    %v46 = vld [vmem:[#allocation5] sm:$0x3]
    %v47 = vld [vmem:[%s2] sm:$0x3]
    %v48 = vunpack.c.0.s8 %v47
    %v49 = vld [vmem:[%s3] sm:$0x3]
    %v50 = vunpack.c.0.s8 %v49
    %vm51 = vnez %v46
    %v52 = vsel %vm51, 16843009, 0
    %v53 = vunpack.c.0.s8 %v52
    %vm54 = vcmp.ne.s32.totalorder %v53, 0
    %v55 = vsel %vm54, %v48, 4
    %v56 = vsel %vm54, %v50, 4
    %vm57 = vcmp.eq.s32.totalorder %v55, 0
    %v58 = vsel %vm57, 1, 0
    %vm59 = vcmp.eq.s32.totalorder %v56, 0
    %v60 = vsel %vm59, 1, 0
    %v61 = vsub.s32 %v58, %v60
    %v62 = vcvt.s32.f32 %v61
    %v63 = vld [vmem:[#allocation2] ss:$4 sm:$0x3]
    %s64 = scalar_lea.vmem [#allocation2], 8
    %v65 = vld [vmem:[%s64] ss:$4 sm:$0x3]
    %v68 = vunpack.c.l.s4 1966171168
    %v69 = vunpack.c.0.s8 %v68
    %v70 = vlaneseq
    %v71 = vshrl.u32 %v70, 7
    %v72 = vsub.s32 %v69, %v71
    %v73 = vrot.slane %v62, %v72
    %v74 = vcombine.high %v73, %v73
    %v76 = vunpack.c.l.s4 1966171168
    %v77 = vunpack.c.0.s8 %v76
    %v78 = vlaneseq
    %v79 = vshrl.u32 %v78, 7
    %v80 = vsub.s32 %v77, %v79
    %v81 = vrot.slane %v73, %v80
    %v83 = vunpack.c.l.s4 1966171168
    %v84 = vunpack.c.0.s8 %v83
    %v85 = vlaneseq
    %v86 = vshrl.u32 %v85, 7
    %v87 = vsub.s32 %v84, %v86
    %v88 = vrot.slane %v74, %v87
    %v91 = vmul.f32 %v63, %v81
    %v92 = vmul.f32 %v65, %v88
    %v93 = vadd.f32 %v91, 0.0
    %v94 = vadd.f32 %v92, 0.0
    %vm95 = vcmp.eq.s32.totalorder %v55, 1
    %v96 = vsel %vm95, 1, 0
    %vm97 = vcmp.eq.s32.totalorder %v56, 1
    %v98 = vsel %vm97, 1, 0
    %v99 = vsub.s32 %v96, %v98
    %v100 = vcvt.s32.f32 %v99
    %s101 = scalar_lea.vmem [#allocation2], 1
    %v102 = vld [vmem:[%s101] ss:$4 sm:$0x3]
    %s103 = scalar_lea.vmem [#allocation2], 9
    %v104 = vld [vmem:[%s103] ss:$4 sm:$0x3]
    %v107 = vunpack.c.l.s4 1966171168
    %v108 = vunpack.c.0.s8 %v107
    %v109 = vlaneseq
    %v110 = vshrl.u32 %v109, 7
    %v111 = vsub.s32 %v108, %v110
    %v112 = vrot.slane %v100, %v111
    %v113 = vcombine.high %v112, %v112
    %v115 = vunpack.c.l.s4 1966171168
    %v116 = vunpack.c.0.s8 %v115
    %v117 = vlaneseq
    %v118 = vshrl.u32 %v117, 7
    %v119 = vsub.s32 %v116, %v118
    %v120 = vrot.slane %v112, %v119
    %v122 = vunpack.c.l.s4 1966171168
    %v123 = vunpack.c.0.s8 %v122
    %v124 = vlaneseq
    %v125 = vshrl.u32 %v124, 7
    %v126 = vsub.s32 %v123, %v125
    %v127 = vrot.slane %v113, %v126
    %v130 = vmul.f32 %v102, %v120
    %v131 = vmul.f32 %v104, %v127
    %v132 = vadd.f32 %v93, %v130
    %v133 = vadd.f32 %v94, %v131
    %vm134 = vcmp.eq.s32.totalorder %v55, 2
    %v135 = vsel %vm134, 1, 0
    %vm136 = vcmp.eq.s32.totalorder %v56, 2
    %v137 = vsel %vm136, 1, 0
    %v138 = vsub.s32 %v135, %v137
    %v139 = vcvt.s32.f32 %v138
    %s140 = scalar_lea.vmem [#allocation2], 2
    %v141 = vld [vmem:[%s140] ss:$4 sm:$0x3]
    %s142 = scalar_lea.vmem [#allocation2], 10
    %v143 = vld [vmem:[%s142] ss:$4 sm:$0x3]
    %v146 = vunpack.c.l.s4 1966171168
    %v147 = vunpack.c.0.s8 %v146
    %v148 = vlaneseq
    %v149 = vshrl.u32 %v148, 7
    %v150 = vsub.s32 %v147, %v149
    %v151 = vrot.slane %v139, %v150
    %v152 = vcombine.high %v151, %v151
    %v154 = vunpack.c.l.s4 1966171168
    %v155 = vunpack.c.0.s8 %v154
    %v156 = vlaneseq
    %v157 = vshrl.u32 %v156, 7
    %v158 = vsub.s32 %v155, %v157
    %v159 = vrot.slane %v151, %v158
    %v161 = vunpack.c.l.s4 1966171168
    %v162 = vunpack.c.0.s8 %v161
    %v163 = vlaneseq
    %v164 = vshrl.u32 %v163, 7
    %v165 = vsub.s32 %v162, %v164
    %v166 = vrot.slane %v152, %v165
    %v169 = vmul.f32 %v141, %v159
    %v170 = vmul.f32 %v143, %v166
    %v171 = vadd.f32 %v132, %v169
    %v172 = vadd.f32 %v133, %v170
    %vm173 = vcmp.eq.s32.totalorder %v55, 3
    %v174 = vsel %vm173, 1, 0
    %vm175 = vcmp.eq.s32.totalorder %v56, 3
    %v176 = vsel %vm175, 1, 0
    %v177 = vsub.s32 %v174, %v176
    %v178 = vcvt.s32.f32 %v177
    %s179 = scalar_lea.vmem [#allocation2], 3
    %v180 = vld [vmem:[%s179] ss:$4 sm:$0x3]
    %s181 = scalar_lea.vmem [#allocation2], 11
    %v182 = vld [vmem:[%s181] ss:$4 sm:$0x3]
    %v185 = vunpack.c.l.s4 1966171168
    %v186 = vunpack.c.0.s8 %v185
    %v187 = vlaneseq
    %v188 = vshrl.u32 %v187, 7
    %v189 = vsub.s32 %v186, %v188
    %v190 = vrot.slane %v178, %v189
    %v191 = vcombine.high %v190, %v190
    %v193 = vunpack.c.l.s4 1966171168
    %v194 = vunpack.c.0.s8 %v193
    %v195 = vlaneseq
    %v196 = vshrl.u32 %v195, 7
    %v197 = vsub.s32 %v194, %v196
    %v198 = vrot.slane %v190, %v197
    %v200 = vunpack.c.l.s4 1966171168
    %v201 = vunpack.c.0.s8 %v200
    %v202 = vlaneseq
    %v203 = vshrl.u32 %v202, 7
    %v204 = vsub.s32 %v201, %v203
    %v205 = vrot.slane %v191, %v204
    %v208 = vmul.f32 %v180, %v198
    %v209 = vmul.f32 %v182, %v205
    %v210 = vadd.f32 %v171, %v208
    %v211 = vadd.f32 %v172, %v209
    %v214 = vcombine.low %v210, %v211
    %v216 = vunpack.c.l.s4 1966171168
    %v217 = vunpack.c.0.s8 %v216
    %v218 = vlaneseq
    %v219 = vshrl.u32 %v218, 7
    %v220 = vsub.s32 %v217, %v219
    %v221 = vrot.slane %v214, %v220
    %v222 = vcombine.high %v221, %v221
    %v224 = vunpack.c.l.s4 1966171168
    %v225 = vunpack.c.0.s8 %v224
    %v226 = vlaneseq
    %v227 = vshrl.u32 %v226, 7
    %v228 = vsub.s32 %v225, %v227
    %v229 = vrot.slane %v221, %v228
    %v231 = vunpack.c.l.s4 1966171168
    %v232 = vunpack.c.0.s8 %v231
    %v233 = vlaneseq
    %v234 = vshrl.u32 %v233, 7
    %v235 = vsub.s32 %v232, %v234
    %v236 = vrot.slane %v222, %v235
    %vm239 = vcmask 1041408
    %v240 = vsel %vm239, %v229, 0.0
    %v241 = vsel %vm239, %v236, 0.0
    %v242 = vadd.f32 %v240, %v241
    %243 = vadd.xlane.f32.xlu0 %v242
    %v244 = vpop.xlane.xlu0 %243
    %v245 = vrot.slane %v244, 4
    %v246 = vadd.f32 %v244, %v245
    %v247 = vrot.slane %v246, 2
    %v248 = vadd.f32 %v246, %v247
    %v249 = vrot.slane %v248, 1
    %v250 = vadd.f32 %v248, %v249
    %s251 = vtos %v250
    %s252 = scalar_lea.smem [#allocation7], 0
    %253 = sst [smem:[%s252]] %s251
    // Predicated region
    $region26: #{tpu_custom_call.1} parent=1 // pred_check
      _
    $region27: #{tpu_custom_call.1} parent=1 // pred_check_branch
      %255 = sbr.rel (0) target = $region29
    $region28: #{tpu_custom_call.1} parent=1 // pred_region
      %s257 = ssub.s32 16, 16
      %258 = vsyncadd [#allocation4], %s257
      %261 = dma.smem_to_hbm [#allocation7], 16, %s4, [#allocation4]
    $region29: #{tpu_custom_call.1} parent=1 // pred_fallthru
      _
    // Predicated region
    $region30: #{tpu_custom_call.1} parent=1 // pred_check
      _
    $region31: #{tpu_custom_call.1} parent=1 // pred_check_branch
      %263 = sbr.rel (0) target = $region33
    $region32: #{tpu_custom_call.1} parent=1 // pred_region
      %264 = dma.done [#allocation4], 16
    $region33: #{tpu_custom_call.1} parent=1 // pred_fallthru
      _
    %265 = sfence
    %266 = vsyncpa [#allocation3], 1
    %267 = vsyncpa [#allocation6], 1
    %268 = vsyncpa [#allocation4], 1

</llo_original>
